<compile_context>
chip_gen: v7x
topology: tpu7x:2x2x1
jax: 0.10.0
libtpu: 0.0.40
codegen_flags: <defaults>
</compile_context>

<pallas_src>
import functools

import jax
import jax.numpy as jnp
from jax.experimental import pallas as pl
from jax.experimental.pallas import tpu as pltpu


def _round_up(n, m):
    return ((n + m - 1) // m) * m


def fused_affine_kernel(p_ref, x_ref, o_ref):
    # p_ref: (6,) f32 in SMEM = [w00, w01, w10, w11, b0, b1]
    # x_ref: (2, TILE_B) f32 in VMEM  (features on sublanes, batch on lanes)
    # o_ref: (2, TILE_B) f32 in VMEM
    w00 = p_ref[0]
    w01 = p_ref[1]
    w10 = p_ref[2]
    w11 = p_ref[3]
    b0 = p_ref[4]
    b1 = p_ref[5]

    x0 = x_ref[0:1, :]          # (1, TILE_B)
    x1 = x_ref[1:2, :]          # (1, TILE_B)

    # Two VPU multiply-add chains; lane-dense full-width row stores.
    o_ref[0:1, :] = x0 * w00 + x1 * w10 + b0
    o_ref[1:2, :] = x0 * w01 + x1 * w11 + b1


@functools.partial(jax.jit, static_argnames=("tile_b",))
def nn_forward(x, w1, b1, w2, b2, l, *, tile_b=8192):
    """x: (B, 2); w1: (3, 2); b1: (3,); w2: (2, 3); b2: (2,); l: (2,).

    Returns (B, 2) = (x @ w1.T + b1) @ w2.T + b2 + l.
    """
    B = x.shape[0]
    f32 = jnp.float32
    w1 = jnp.asarray(w1, f32)
    b1 = jnp.asarray(b1, f32)
    w2 = jnp.asarray(w2, f32)
    b2 = jnp.asarray(b2, f32)
    l = jnp.asarray(l, f32)

    # Fold both Linear layers + l into one 2x2 affine transform (done once,
    # outside the kernel).
    W = w1.T @ w2.T                                  # (2, 2):  y = x @ W + b
    b = b1 @ w2.T + b2 + l                           # (2,)
    params = jnp.concatenate([W.reshape(-1), b])     # (6,) [w00,w01,w10,w11,b0,b1]

    # Batch on the lane axis: (B, 2) -> (2, B), padded to a multiple of tile.
    tile = min(tile_b, _round_up(B, 128))
    b_pad = _round_up(B, tile)
    x_t = jnp.asarray(x, f32).T                      # (2, B)
    if b_pad != B:
        x_t = jnp.pad(x_t, ((0, 0), (0, b_pad - B)))

    grid = (b_pad // tile,)
    out_t = pl.pallas_call(
        fused_affine_kernel,
        out_shape=jax.ShapeDtypeStruct((2, b_pad), f32),
        grid=grid,
        in_specs=[
            # All 6 fused scalars in one SMEM operand (whole array each step).
            pl.BlockSpec(memory_space=pltpu.MemorySpace.SMEM),
            # Lane-dense batch tiles of the transposed activations.
            pl.BlockSpec((2, tile), lambda i: (0, i)),
        ],
        out_specs=pl.BlockSpec((2, tile), lambda i: (0, i)),
        compiler_params=pltpu.CompilerParams(
            dimension_semantics=("parallel",),
        ),
        cost_estimate=pl.CostEstimate(
            flops=6 * b_pad,
            transcendentals=0,
            bytes_accessed=2 * 2 * b_pad * 4 + 6 * 4,
        ),
    )(params, x_t)

    return out_t[:, :B].T                            # back to (B, 2)


def _torch_like_linear_init(key, out_f, in_f):
    """Deterministic init mimicking nn.Linear default: U(-1/sqrt(fan_in), +)."""
    kw, kb = jax.random.split(key)
    bound = 1.0 / jnp.sqrt(jnp.float32(in_f))
    w = jax.random.uniform(kw, (out_f, in_f), jnp.float32, -bound, bound)
    b = jax.random.uniform(kb, (out_f,), jnp.float32, -bound, bound)
    return w, b


if __name__ == "__main__":
    key = jax.random.PRNGKey(0)
    kx, k1, k2 = jax.random.split(key, 3)

    # Deterministic parameters (shapes from NN.__init__).
    w1, b1 = _torch_like_linear_init(k1, 3, 2)   # Linear(2, 3)
    w2, b2 = _torch_like_linear_init(k2, 2, 3)   # Linear(3, 2)
    l = jnp.array([0.5, 1.0], dtype=jnp.float32)

    # Small batch of inputs with 2 features, as the forward implies.
    B = 256
    x = jax.random.normal(kx, (B, 2), jnp.float32)

    out = jax.block_until_ready(nn_forward(x, w1, b1, w2, b2, l))

    # Pure-JAX reference check (un-fused two-layer form).
    ref = (x @ w1.T + b1) @ w2.T + b2 + l
    assert out.shape == (B, 2)
    assert jnp.allclose(out, ref, atol=1e-5, rtol=1e-5)

    print("KERNEL_OK")
</pallas_src>

<mosaic_0001>
module attributes {stable_mosaic.version = 11 : i64} {
  func.func @fused_affine_kernel(%arg0: i32, %arg1: memref<6xf32, #tpu.memory_space<smem>>, %arg2: memref<2x256xf32, #tpu.memory_space<vmem>>, %arg3: memref<2x256xf32, #tpu.memory_space<vmem>>) attributes {dimension_semantics = [#tpu.dimension_semantics<parallel>], iteration_bounds = array<i64: 1>, scalar_prefetch = 0 : i64, scratch_operands = 0 : i64, tpu.core_type = #tpu.core_type<tc>, window_params = [{transform_indices = @transform_0, window_bounds = array<i64: 6>}, {transform_indices = @transform_1, window_bounds = array<i64: 2, 256>}, {transform_indices = @transform_2, window_bounds = array<i64: 2, 256>}]} {
    %c0 = arith.constant 0 : index
    %0 = memref.load %arg1[%c0] : memref<6xf32, #tpu.memory_space<smem>>
    %c1 = arith.constant 1 : index
    %1 = memref.load %arg1[%c1] : memref<6xf32, #tpu.memory_space<smem>>
    %c2 = arith.constant 2 : index
    %2 = memref.load %arg1[%c2] : memref<6xf32, #tpu.memory_space<smem>>
    %c3 = arith.constant 3 : index
    %3 = memref.load %arg1[%c3] : memref<6xf32, #tpu.memory_space<smem>>
    %c4 = arith.constant 4 : index
    %4 = memref.load %arg1[%c4] : memref<6xf32, #tpu.memory_space<smem>>
    %c5 = arith.constant 5 : index
    %5 = memref.load %arg1[%c5] : memref<6xf32, #tpu.memory_space<smem>>
    %c0_0 = arith.constant 0 : index
    %c0_1 = arith.constant 0 : index
    %6 = vector.load %arg2[%c0_0, %c0_1] : memref<2x256xf32, #tpu.memory_space<vmem>>, vector<1x256xf32>
    %c1_2 = arith.constant 1 : index
    %c0_3 = arith.constant 0 : index
    %7 = vector.load %arg2[%c1_2, %c0_3] : memref<2x256xf32, #tpu.memory_space<vmem>>, vector<1x256xf32>
    %8 = vector.broadcast %0 : f32 to vector<1x256xf32>
    %9 = arith.mulf %6, %8 : vector<1x256xf32>
    %10 = vector.broadcast %2 : f32 to vector<1x256xf32>
    %11 = arith.mulf %7, %10 : vector<1x256xf32>
    %12 = arith.addf %9, %11 : vector<1x256xf32>
    %13 = vector.broadcast %4 : f32 to vector<1x256xf32>
    %14 = arith.addf %12, %13 : vector<1x256xf32>
    %c0_4 = arith.constant 0 : index
    %c0_5 = arith.constant 0 : index
    %15 = vector.load %arg3[%c0_4, %c0_5] : memref<2x256xf32, #tpu.memory_space<vmem>>, vector<1x256xf32>
    tpu.vector_store %arg3[%c0_4, %c0_5], %14 {strides = array<i32>} : memref<2x256xf32, #tpu.memory_space<vmem>>, vector<1x256xf32>,
    %16 = vector.broadcast %1 : f32 to vector<1x256xf32>
    %17 = arith.mulf %6, %16 : vector<1x256xf32>
    %18 = vector.broadcast %3 : f32 to vector<1x256xf32>
    %19 = arith.mulf %7, %18 : vector<1x256xf32>
    %20 = arith.addf %17, %19 : vector<1x256xf32>
    %21 = vector.broadcast %5 : f32 to vector<1x256xf32>
    %22 = arith.addf %20, %21 : vector<1x256xf32>
    %c1_6 = arith.constant 1 : index
    %c0_7 = arith.constant 0 : index
    %23 = vector.load %arg3[%c1_6, %c0_7] : memref<2x256xf32, #tpu.memory_space<vmem>>, vector<1x256xf32>
    tpu.vector_store %arg3[%c1_6, %c0_7], %22 {strides = array<i32>} : memref<2x256xf32, #tpu.memory_space<vmem>>, vector<1x256xf32>,
    return
  }
  func.func @transform_0(%arg0: i32) -> i32 {
    %c0_i32 = arith.constant 0 : i32
    %c0_i32_0 = arith.constant 0 : i32
    return %c0_i32 : i32
  }
  func.func @transform_1(%arg0: i32) -> (i32, i32) {
    %c0_i32 = arith.constant 0 : i32
    %c0_i32_0 = arith.constant 0 : i32
    return %c0_i32, %arg0 : i32, i32
  }
  func.func @transform_2(%arg0: i32) -> (i32, i32) {
    %c0_i32 = arith.constant 0 : i32
    %c0_i32_0 = arith.constant 0 : i32
    return %c0_i32, %arg0 : i32, i32
  }
}

</mosaic_0001>

<llo_original>
// kernel: nn_forward.1
$region0: #{nn_forward.1}
  #allocation0 [shape = 'u32[]', space=smem, size = 0x4, offset = 0x4, fixed_abs, tag = 'smem constant byte address 0x4 - core index']
  #allocation1 [shape = 'u32[144,128]{1,0:T(1,128)}', space=vmem, size = 0x12000, scoped, tag = 'internal scratch']
  %s0 = inlined_call_operand.vmem [shape: f32[6], index: 0, kind: input, shape index: {}]
  %s1 = inlined_call_operand.vmem [shape: f32[2,256], index: 1, kind: input, shape index: {}]
  %s2 = inlined_call_operand.hbm [shape: f32[2,256], index: 2, kind: output, shape index: {}]
  %s3 = sld [smem:[#allocation0]]
  $region22: #{nn_forward.1} parent=0
    _
  %s5 = ssub.s32 1, %s3
  %s6 = scalar_select 0, %s5, %s3
  $region1: #{nn_forward.1} parent=0
    #allocation2 [shape = 'u8[512]{0}', space=smem, size = 0x200, scoped, tag = 'input window, operand 0, single buffered']
    #allocation3 [shape = 's32[1]{0}', space=sflag, size = 0x4, scoped, tag = 'scoped memory for nn_forward.1']
    #allocation4 [shape = 's32[1]{0}', space=sflag, size = 0x4, scoped, tag = 'scoped memory for nn_forward.1']
    #allocation5 [shape = 'u8[2048]{0}', space=vmem, size = 0x800, scoped, tag = 'output window, operand 0, single buffered']
    %7 = vsyncpa [#allocation4], 0
    %8 = vsyncpa [#allocation3], 0
    // Predicated region
    $region2: #{nn_forward.1} parent=1 // pred_check
      _
    $region3: #{nn_forward.1} parent=1 // pred_check_branch
      %10 = sbr.rel (0) target = $region5
    $region4: #{nn_forward.1} parent=1 // pred_region
      %s12 = ssub.s32 16, 16
      %13 = vsyncadd [#allocation4], %s12
      %s15 = sshll.u32 %s0, 4
      %s16 = int_to_ptr.vmem [resolvable:$true] %s15
      %18 = dma.vmem_to_smem %s16, 16, [#allocation2], [#allocation4]
    $region5: #{nn_forward.1} parent=1 // pred_fallthru
      _
    // Predicated region
    $region6: #{nn_forward.1} parent=1 // pred_check
      _
    $region7: #{nn_forward.1} parent=1 // pred_check_branch
      %20 = sbr.rel (0) target = $region9
    $region8: #{nn_forward.1} parent=1 // pred_region
      _
    $region9: #{nn_forward.1} parent=1 // pred_fallthru
      _
    // Predicated region
    $region10: #{nn_forward.1} parent=1 // pred_check
      _
    $region11: #{nn_forward.1} parent=1 // pred_check_branch
      %22 = sbr.rel (0) target = $region13
    $region12: #{nn_forward.1} parent=1 // pred_region
      %23 = dma.done [#allocation4], 16
    $region13: #{nn_forward.1} parent=1 // pred_fallthru
      _
    %24 = sfence
    %s25 = sld [smem:[#allocation2]]
    %s26 = sld [smem:[#allocation2 + $0x1]]
    %s27 = sld [smem:[#allocation2 + $0x2]]
    %s28 = sld [smem:[#allocation2 + $0x3]]
    %s29 = sld [smem:[#allocation2 + $0x4]]
    %s30 = sld [smem:[#allocation2 + $0x5]]
    %v31 = vld [vmem:[%s1] ss:$2 sm:$0x3]
    %s32 = scalar_lea.vmem %s1, 1
    %v33 = vld [vmem:[%s32] ss:$2 sm:$0x3]
    %v34 = vstv %s25
    %v35 = vmul.f32 %v31, %v34
    %v36 = vstv %s27
    %v37 = vmul.f32 %v33, %v36
    %v38 = vadd.f32 %v35, %v37
    %v39 = vstv %s29
    %v40 = vadd.f32 %v38, %v39
    %v41 = vlaneseq
    %vm42 = vcmp.ge.s32.totalorder %v41, 0
    %vm43 = vcmp.lt.s32.totalorder %v41, 256
    %vm44 = vmand %vm42, %vm43
    %45 = vst.msk [vmem:[#allocation5] ss:$2 sm:$0x3] %vm44, %v40
    %v46 = vstv %s26
    %v47 = vmul.f32 %v31, %v46
    %v48 = vstv %s28
    %v49 = vmul.f32 %v33, %v48
    %v50 = vadd.f32 %v47, %v49
    %v51 = vstv %s30
    %v52 = vadd.f32 %v50, %v51
    %s53 = scalar_lea.vmem [#allocation5], 1
    %54 = vst.msk [vmem:[%s53] ss:$2 sm:$0x3] %vm44, %v52
    // Predicated region
    $region14: #{nn_forward.1} parent=1 // pred_check
      _
    $region15: #{nn_forward.1} parent=1 // pred_check_branch
      %56 = sbr.rel (0) target = $region17
    $region16: #{nn_forward.1} parent=1 // pred_region
      %s58 = ssub.s32 64, 64
      %59 = vsyncadd [#allocation3], %s58
      %s61 = sshll.u32 [#allocation5], 4
      %s62 = int_to_ptr.vmem [resolvable:$true] %s61
      %64 = dma.vmem_to_hbm [thread:$0]  %s62, 64, %s2, [#allocation3]
    $region17: #{nn_forward.1} parent=1 // pred_fallthru
      _
    // Predicated region
    $region18: #{nn_forward.1} parent=1 // pred_check
      _
    $region19: #{nn_forward.1} parent=1 // pred_check_branch
      %66 = sbr.rel (0) target = $region21
    $region20: #{nn_forward.1} parent=1 // pred_region
      %67 = dma.done [#allocation3], 64
    $region21: #{nn_forward.1} parent=1 // pred_fallthru
      _
    %68 = vsyncpa [#allocation3], 1
    %69 = vsyncpa [#allocation4], 1

</llo_original>
